<compile_context>
chip_gen: v6e
topology: v6e:2x2x1
jax: 0.10.0
libtpu: 0.0.40
codegen_flags: <defaults>
</compile_context>

<pallas_src>
import jax
import jax.numpy as jnp
import numpy as np
from jax.experimental import pallas as pl
from jax.experimental.pallas import tpu as pltpu


# ----------------------------------------------------------------------------
# Deterministic parameter init mirroring torch.nn.init.orthogonal_(w, gain) and
# constant_(b, 0.0).  Weights are stored in the torch (out_features, in_features)
# layout, which is exactly what the batch-on-lanes kernel wants (y = W @ xT).
# ----------------------------------------------------------------------------
def orthogonal_init(key, out_features, in_features, gain):
    """Matches torch.nn.init.orthogonal_ on a (out, in) weight."""
    rows, cols = out_features, in_features
    flat = jax.random.normal(key, (rows, cols), dtype=jnp.float32)
    if rows < cols:
        flat = flat.T
    q, r = jnp.linalg.qr(flat)
    d = jnp.sign(jnp.diagonal(r))
    q = q * d[None, :]
    if rows < cols:
        q = q.T
    return gain * q                                      # (out, in)


def init_value_params(key, state_dim, hd):
    k1, k2, k3 = jax.random.split(key, 3)
    gain = float(np.sqrt(2.0))
    w1 = orthogonal_init(k1, hd, state_dim, gain)        # (hd, state_dim)
    b1 = jnp.zeros((hd, 1), jnp.float32)
    w2 = orthogonal_init(k2, hd, hd, gain)               # (hd, hd)
    b2 = jnp.zeros((hd, 1), jnp.float32)
    w3 = orthogonal_init(k3, 1, hd, gain)                # (1, hd)
    b3 = jnp.zeros((1, 1), jnp.float32)
    return w1, b1, w2, b2, w3, b3


# ----------------------------------------------------------------------------
# Pallas kernel: fused 3-layer MLP forward on one batch tile (batch on lanes).
# ----------------------------------------------------------------------------
def value_mlp_kernel(xT_ref, w1_ref, b1_ref, w2_ref, b2_ref, w3_ref, b3_ref, o_ref):
    # bf16 operands for the MXU, f32 accumulation; bias add + tanh stay f32.
    x = xT_ref[...].astype(jnp.bfloat16)                                    # (S, TB)
    w1 = w1_ref[...].astype(jnp.bfloat16)                                   # (H, S)
    h1 = jnp.tanh(
        jnp.dot(w1, x, preferred_element_type=jnp.float32) + b1_ref[...]
    )                                                                       # (H, TB) f32

    w2 = w2_ref[...].astype(jnp.bfloat16)                                   # (H, H)
    h2 = jnp.tanh(
        jnp.dot(w2, h1.astype(jnp.bfloat16), preferred_element_type=jnp.float32)
        + b2_ref[...]
    )                                                                       # (H, TB) f32

    w3 = w3_ref[...].astype(jnp.bfloat16)                                   # (1, H)
    o_ref[...] = (
        jnp.dot(w3, h2.astype(jnp.bfloat16), preferred_element_type=jnp.float32)
        + b3_ref[0, 0]                                                      # SMEM scalar
    )                                                                       # (1, TB) lane-dense


def value_forward(x, params, *, tile_b=1024):
    """x: (B, state_dim) f32 -> (B,) f32.  tile_b: batch tile (use 1024+ for real RL batches)."""
    w1, b1, w2, b2, w3, b3 = params
    B, state_dim = x.shape
    hd = w1.shape[0]

    # Batch on lanes: transpose once in the wrapper, pad B up to a tile multiple.
    padded_b = ((B + tile_b - 1) // tile_b) * tile_b
    xT = x.T                                             # (state_dim, B)
    if padded_b != B:
        xT = jnp.pad(xT, ((0, 0), (0, padded_b - B)))
    num_tiles = padded_b // tile_b

    grid_spec = pltpu.PrefetchScalarGridSpec(
        num_scalar_prefetch=0,
        grid=(num_tiles,),
        in_specs=[
            pl.BlockSpec((state_dim, tile_b), lambda i: (0, i)),   # x tile (batch on lanes)
            pl.BlockSpec((hd, state_dim), lambda i: (0, 0)),       # W1 resident
            pl.BlockSpec((hd, 1), lambda i: (0, 0)),               # b1 resident
            pl.BlockSpec((hd, hd), lambda i: (0, 0)),              # W2 resident
            pl.BlockSpec((hd, 1), lambda i: (0, 0)),               # b2 resident
            pl.BlockSpec((1, hd), lambda i: (0, 0)),               # W3 resident
            pl.BlockSpec(memory_space=pltpu.MemorySpace.SMEM),     # b3 scalar in SMEM
        ],
        out_specs=pl.BlockSpec((1, tile_b), lambda i: (0, i)),     # lane-dense output
    )

    flops = 2 * padded_b * (state_dim * hd + hd * hd + hd)
    transcendentals = 2 * padded_b * hd
    bytes_accessed = 4 * (
        padded_b * state_dim + padded_b                            # x in, out
        + hd * state_dim + hd + hd * hd + hd + hd + 1              # params
    )

    out = pl.pallas_call(
        value_mlp_kernel,
        out_shape=jax.ShapeDtypeStruct((1, padded_b), jnp.float32),
        grid_spec=grid_spec,
        compiler_params=pltpu.CompilerParams(
            dimension_semantics=("parallel",),                     # shard batch across TCs (v7x)
        ),
        cost_estimate=pl.CostEstimate(
            flops=flops,
            transcendentals=transcendentals,
            bytes_accessed=bytes_accessed,
        ),
    )(xT, w1, b1, w2, b2, w3, b3)

    return out[0, :B]                                              # == .squeeze(1) -> (B,)


# ----------------------------------------------------------------------------
# Pure-JAX reference (same batch-on-lanes math) for sanity checks.
# ----------------------------------------------------------------------------
def value_forward_ref(x, params, matmul_dtype=jnp.float32):
    w1, b1, w2, b2, w3, b3 = params
    xT = x.T
    h1 = jnp.tanh(
        jnp.dot(w1.astype(matmul_dtype), xT.astype(matmul_dtype),
                preferred_element_type=jnp.float32) + b1)
    h2 = jnp.tanh(
        jnp.dot(w2.astype(matmul_dtype), h1.astype(matmul_dtype),
                preferred_element_type=jnp.float32) + b2)
    out = jnp.dot(w3.astype(matmul_dtype), h2.astype(matmul_dtype),
                  preferred_element_type=jnp.float32) + b3
    return out[0, :]


if __name__ == "__main__":
    B, STATE_DIM, HD = 256, 16, 32
    TILE_B = 128                       # small demo tile; use 1024+ for real RL batches

    key = jax.random.PRNGKey(0)
    k_x, k_p = jax.random.split(key)
    x = jax.random.normal(k_x, (B, STATE_DIM), dtype=jnp.float32)
    params = init_value_params(k_p, STATE_DIM, HD)

    out = value_forward(x, params, tile_b=TILE_B)
    out = jax.block_until_ready(out)
    assert out.shape == (B,), out.shape

    # Tight check vs a bf16-MXU reference (same operand precision as the kernel).
    ref_bf16 = value_forward_ref(x, params, matmul_dtype=jnp.bfloat16)
    np.testing.assert_allclose(np.asarray(out), np.asarray(ref_bf16), rtol=1e-3, atol=1e-3)

    # Loose check vs the full-f32 reference (bf16 MXU operands change numerics slightly).
    ref_f32 = value_forward_ref(x, params, matmul_dtype=jnp.float32)
    np.testing.assert_allclose(np.asarray(out), np.asarray(ref_f32), rtol=5e-2, atol=5e-2)

    print("KERNEL_OK")
</pallas_src>

<mosaic_0001>
module attributes {stable_mosaic.version = 11 : i64} {
  func.func @value_mlp_kernel(%arg0: i32, %arg1: memref<16x128xf32, #tpu.memory_space<vmem>>, %arg2: memref<32x16xf32, #tpu.memory_space<vmem>>, %arg3: memref<32x1xf32, #tpu.memory_space<vmem>>, %arg4: memref<32x32xf32, #tpu.memory_space<vmem>>, %arg5: memref<32x1xf32, #tpu.memory_space<vmem>>, %arg6: memref<1x32xf32, #tpu.memory_space<vmem>>, %arg7: memref<1x1xf32, #tpu.memory_space<smem>>, %arg8: memref<1x128xf32, #tpu.memory_space<vmem>>) attributes {dimension_semantics = [#tpu.dimension_semantics<parallel>], iteration_bounds = array<i64: 2>, scalar_prefetch = 0 : i64, scratch_operands = 0 : i64, tpu.core_type = #tpu.core_type<tc>, window_params = [{transform_indices = @transform_0, window_bounds = array<i64: 16, 128>}, {pipeline_mode = #tpu.pipeline_mode<synchronous>, transform_indices = @transform_1, window_bounds = array<i64: 32, 16>}, {pipeline_mode = #tpu.pipeline_mode<synchronous>, transform_indices = @transform_2, window_bounds = array<i64: 32, 1>}, {pipeline_mode = #tpu.pipeline_mode<synchronous>, transform_indices = @transform_3, window_bounds = array<i64: 32, 32>}, {pipeline_mode = #tpu.pipeline_mode<synchronous>, transform_indices = @transform_4, window_bounds = array<i64: 32, 1>}, {pipeline_mode = #tpu.pipeline_mode<synchronous>, transform_indices = @transform_5, window_bounds = array<i64: 1, 32>}, {transform_indices = @transform_6, window_bounds = array<i64: 1, 1>}, {transform_indices = @transform_7, window_bounds = array<i64: 1, 128>}]} {
    %c0 = arith.constant 0 : index
    %c0_0 = arith.constant 0 : index
    %0 = vector.load %arg1[%c0, %c0_0] : memref<16x128xf32, #tpu.memory_space<vmem>>, vector<16x128xf32>
    %1 = arith.truncf %0 : vector<16x128xf32> to vector<16x128xbf16>
    %c0_1 = arith.constant 0 : index
    %c0_2 = arith.constant 0 : index
    %2 = vector.load %arg2[%c0_1, %c0_2] : memref<32x16xf32, #tpu.memory_space<vmem>>, vector<32x16xf32>
    %3 = arith.truncf %2 : vector<32x16xf32> to vector<32x16xbf16>
    %cst = arith.constant dense<0.000000e+00> : vector<32x128xf32>
    %4 = tpu.matmul %3, %1, %cst {dimension_numbers = #tpu.dot_dimension_numbers<[1], [0], [0], [1], [0, 0, 1, 1], [], []>} : vector<32x16xbf16>, vector<16x128xbf16>, vector<32x128xf32> -> vector<32x128xf32>
    %c0_3 = arith.constant 0 : index
    %c0_4 = arith.constant 0 : index
    %5 = vector.load %arg3[%c0_3, %c0_4] : memref<32x1xf32, #tpu.memory_space<vmem>>, vector<32x1xf32>
    %6 = vector.broadcast %5 : vector<32x1xf32> to vector<32x128xf32>
    %7 = arith.addf %4, %6 : vector<32x128xf32>
    %8 = math.tanh %7 : vector<32x128xf32>
    %c0_5 = arith.constant 0 : index
    %c0_6 = arith.constant 0 : index
    %9 = vector.load %arg4[%c0_5, %c0_6] : memref<32x32xf32, #tpu.memory_space<vmem>>, vector<32x32xf32>
    %10 = arith.truncf %9 : vector<32x32xf32> to vector<32x32xbf16>
    %11 = arith.truncf %8 : vector<32x128xf32> to vector<32x128xbf16>
    %cst_7 = arith.constant dense<0.000000e+00> : vector<32x128xf32>
    %12 = tpu.matmul %10, %11, %cst_7 {dimension_numbers = #tpu.dot_dimension_numbers<[1], [0], [0], [1], [0, 0, 1, 1], [], []>} : vector<32x32xbf16>, vector<32x128xbf16>, vector<32x128xf32> -> vector<32x128xf32>
    %c0_8 = arith.constant 0 : index
    %c0_9 = arith.constant 0 : index
    %13 = vector.load %arg5[%c0_8, %c0_9] : memref<32x1xf32, #tpu.memory_space<vmem>>, vector<32x1xf32>
    %14 = vector.broadcast %13 : vector<32x1xf32> to vector<32x128xf32>
    %15 = arith.addf %12, %14 : vector<32x128xf32>
    %16 = math.tanh %15 : vector<32x128xf32>
    %c0_10 = arith.constant 0 : index
    %c0_11 = arith.constant 0 : index
    %17 = vector.load %arg6[%c0_10, %c0_11] : memref<1x32xf32, #tpu.memory_space<vmem>>, vector<1x32xf32>
    %18 = arith.truncf %17 : vector<1x32xf32> to vector<1x32xbf16>
    %19 = arith.truncf %16 : vector<32x128xf32> to vector<32x128xbf16>
    %cst_12 = arith.constant dense<0.000000e+00> : vector<1x128xf32>
    %20 = tpu.matmul %18, %19, %cst_12 {dimension_numbers = #tpu.dot_dimension_numbers<[1], [0], [0], [1], [0, 0, 1, 1], [], []>} : vector<1x32xbf16>, vector<32x128xbf16>, vector<1x128xf32> -> vector<1x128xf32>
    %c0_13 = arith.constant 0 : index
    %c0_14 = arith.constant 0 : index
    %21 = memref.load %arg7[%c0_13, %c0_14] : memref<1x1xf32, #tpu.memory_space<smem>>
    %22 = vector.broadcast %21 : f32 to vector<1x128xf32>
    %23 = arith.addf %20, %22 : vector<1x128xf32>
    %c0_15 = arith.constant 0 : index
    %c0_16 = arith.constant 0 : index
    %24 = vector.load %arg8[%c0_15, %c0_16] : memref<1x128xf32, #tpu.memory_space<vmem>>, vector<1x128xf32>
    tpu.vector_store %arg8[%c0_15, %c0_16], %23 {strides = array<i32>} : memref<1x128xf32, #tpu.memory_space<vmem>>, vector<1x128xf32>,
    return
  }
  func.func @transform_0(%arg0: i32) -> (i32, i32) {
    %c0_i32 = arith.constant 0 : i32
    %c0_i32_0 = arith.constant 0 : i32
    return %c0_i32, %arg0 : i32, i32
  }
  func.func @transform_1(%arg0: i32) -> (i32, i32) {
    %c0_i32 = arith.constant 0 : i32
    %c0_i32_0 = arith.constant 0 : i32
    %c0_i32_1 = arith.constant 0 : i32
    return %c0_i32, %c0_i32_0 : i32, i32
  }
  func.func @transform_2(%arg0: i32) -> (i32, i32) {
    %c0_i32 = arith.constant 0 : i32
    %c0_i32_0 = arith.constant 0 : i32
    %c0_i32_1 = arith.constant 0 : i32
    return %c0_i32, %c0_i32_0 : i32, i32
  }
  func.func @transform_3(%arg0: i32) -> (i32, i32) {
    %c0_i32 = arith.constant 0 : i32
    %c0_i32_0 = arith.constant 0 : i32
    %c0_i32_1 = arith.constant 0 : i32
    return %c0_i32, %c0_i32_0 : i32, i32
  }
  func.func @transform_4(%arg0: i32) -> (i32, i32) {
    %c0_i32 = arith.constant 0 : i32
    %c0_i32_0 = arith.constant 0 : i32
    %c0_i32_1 = arith.constant 0 : i32
    return %c0_i32, %c0_i32_0 : i32, i32
  }
  func.func @transform_5(%arg0: i32) -> (i32, i32) {
    %c0_i32 = arith.constant 0 : i32
    %c0_i32_0 = arith.constant 0 : i32
    %c0_i32_1 = arith.constant 0 : i32
    return %c0_i32, %c0_i32_0 : i32, i32
  }
  func.func @transform_6(%arg0: i32) -> (i32, i32) {
    %c0_i32 = arith.constant 0 : i32
    %c0_i32_0 = arith.constant 0 : i32
    %c0_i32_1 = arith.constant 0 : i32
    return %c0_i32, %c0_i32_0 : i32, i32
  }
  func.func @transform_7(%arg0: i32) -> (i32, i32) {
    %c0_i32 = arith.constant 0 : i32
    %c0_i32_0 = arith.constant 0 : i32
    return %c0_i32, %arg0 : i32, i32
  }
}

</mosaic_0001>

<llo_original>
// kernel: tpu_custom_call.1
$region0: #{tpu_custom_call.1}
  #allocation0 [shape = 'u32[]', space=smem, size = 0x4, offset = 0x4, fixed_abs, tag = 'smem constant byte address 0x4 - core index']
  #allocation1 [shape = 'u32[144,128]{1,0:T(1,128)}', space=vmem, size = 0x12000, scoped, tag = 'internal scratch']
  #allocation2 [shape = 'f32[1,1]{1,0:T(1,128)S(6)}', space=smem, size = 0x200, scoped, tag = 'scoped memory for tpu_custom_call.1']
  %s0 = inlined_call_operand.vmem [shape: f32[16,256], index: 0, kind: input, shape index: {}]
  %s1 = inlined_call_operand.vmem [shape: f32[32,16], index: 1, kind: input, shape index: {}]
  %s2 = inlined_call_operand.vmem [shape: f32[32,1], index: 2, kind: input, shape index: {}]
  %s3 = inlined_call_operand.vmem [shape: f32[32,32], index: 3, kind: input, shape index: {}]
  %s4 = inlined_call_operand.vmem [shape: f32[32,1], index: 4, kind: input, shape index: {}]
  %s5 = inlined_call_operand.vmem [shape: f32[1,32], index: 5, kind: input, shape index: {}]
  %s6 = inlined_call_operand.<no memory space> [shape: f32[1,1], index: 6, kind: input, shape index: {}]
  %s7 = inlined_call_operand.hbm [shape: f32[1,256], index: 7, kind: output, shape index: {}]
  %s8 = sld [smem:[#allocation0]]
  $region99: #{tpu_custom_call.1} parent=0
    _
  %s10 = ssub.s32 1, %s8
  %s11 = scalar_select 0, %s10, %s8
  %12 = sst [smem:[#allocation2]] %s6
  $region1: #{tpu_custom_call.1} parent=0
    #allocation3 [shape = 'u8[16384]{0}', space=vmem, size = 0x4000, scoped, tag = 'input window, operand 0']
    #allocation4 [shape = 'u8[1024]{0}', space=vmem, size = 0x400, scoped, tag = 'output window, operand 0']
    #allocation5 [shape = 's32[2]{0}', space=sflag, size = 0x8, scoped, tag = 'scoped memory for tpu_custom_call.1']
    %13 = vsyncpa [#allocation5], 0
    %s14 = scalar_lea.sflag [#allocation5], 1
    %15 = vsyncpa %s14, 0
    loop: start=0, step=1, limit=4
    $region2: #{tpu_custom_call.1} parent=1 // loop_pre_header
      _
    $region3: #{tpu_custom_call.1} parent=1 // loop_header
      %s17 = sphi 0, %s21
      %p18 = scmp.ge.s32.totalorder %s17, 4
      %s27 = sphi 0, %s29
      %s30 = sphi 0, %s27
      %s31 = sphi 0, %s30
      %s47 = sphi 0, %s31
      %s51 = sphi 0, %s51
      %s53 = sphi 0, %s51
      %s54 = sphi 0, %s53
      %s68 = sphi 0, %s54
      %s72 = sphi 0, %s72
      %s74 = sphi 0, %s72
      %s75 = sphi 0, %s74
      %s89 = sphi 0, %s75
      %s93 = sphi 0, %s93
      %s95 = sphi 0, %s93
      %s96 = sphi 0, %s95
      %s110 = sphi 0, %s96
      %s114 = sphi 0, %s114
      %s116 = sphi 0, %s114
      %s117 = sphi 0, %s116
      %s131 = sphi 0, %s117
      %s135 = sphi 0, %s135
      %s137 = sphi 0, %s135
      %s138 = sphi 0, %s137
      %s152 = sphi 0, %s138
      %s156 = sphi 0, %s156
      %s158 = sphi 0, %s156
      %s159 = sphi 0, %s158
      %s173 = sphi 0, %s159
      %s179 = sphi 0, %s181
      %s182 = sphi 0, %s179
      %s183 = sphi 0, %s182
      %s199 = sphi 0, %s183
    $region4: #{tpu_custom_call.1} parent=1 // loop_header_branch
      %20 = sbr.rel (%p18) target = $region8
    $region5: #{tpu_custom_call.1} parent=1 // loop_body
      %s22 = ssub.s32 %s17, 1
      %s23 = ssub.s32 %s17, 2
      %s24 = sadd.s32 %s17, 1
      %s25 = ssub.s32 %s17, %s24
      %p26 = scmp.eq.s32.totalorder %s25, 0
      %s28 = sadd.s32 %s27, 1
      %s29 = scalar_select %p26, %s27, %s28
      %p32 = pneg %p26
      %p33 = scmp.eq.s32.totalorder %s17, 1
      %p34 = por %p32, %p33
      %p35 = scmp.ne.s32.totalorder %s27, %s30
      %p36 = scmp.eq.s32.totalorder %s17, 0
      %p37 = por %p35, %p36
      %p38 = scmp.ne.s32.totalorder %s27, %s30
      %p39 = scmp.eq.s32.totalorder %s22, 1
      %p40 = por %p38, %p39
      %p41 = scmp.ne.s32.totalorder %s30, %s31
      %p42 = scmp.eq.s32.totalorder %s22, 0
      %p43 = por %p41, %p42
      %p44 = scmp.ne.s32.totalorder %s30, %s31
      %p45 = scmp.eq.s32.totalorder %s23, 1
      %p46 = por %p44, %p45
      %p48 = scmp.ne.s32.totalorder %s31, %s47
      %p49 = scmp.eq.s32.totalorder %s23, 0
      %p50 = por %p48, %p49
      %s52 = sadd.s32 %s51, 1
      %p55 = scmp.eq.s32.totalorder %s17, 1
      %p56 = scmp.ne.s32.totalorder %s51, %s53
      %p57 = scmp.eq.s32.totalorder %s17, 0
      %p58 = por %p56, %p57
      %p59 = scmp.ne.s32.totalorder %s51, %s53
      %p60 = scmp.eq.s32.totalorder %s22, 1
      %p61 = por %p59, %p60
      %p62 = scmp.ne.s32.totalorder %s53, %s54
      %p63 = scmp.eq.s32.totalorder %s22, 0
      %p64 = por %p62, %p63
      %p65 = scmp.ne.s32.totalorder %s53, %s54
      %p66 = scmp.eq.s32.totalorder %s23, 1
      %p67 = por %p65, %p66
      %p69 = scmp.ne.s32.totalorder %s54, %s68
      %p70 = scmp.eq.s32.totalorder %s23, 0
      %p71 = por %p69, %p70
      %s73 = sadd.s32 %s72, 1
      %p76 = scmp.eq.s32.totalorder %s17, 1
      %p77 = scmp.ne.s32.totalorder %s72, %s74
      %p78 = scmp.eq.s32.totalorder %s17, 0
      %p79 = por %p77, %p78
      %p80 = scmp.ne.s32.totalorder %s72, %s74
      %p81 = scmp.eq.s32.totalorder %s22, 1
      %p82 = por %p80, %p81
      %p83 = scmp.ne.s32.totalorder %s74, %s75
      %p84 = scmp.eq.s32.totalorder %s22, 0
      %p85 = por %p83, %p84
      %p86 = scmp.ne.s32.totalorder %s74, %s75
      %p87 = scmp.eq.s32.totalorder %s23, 1
      %p88 = por %p86, %p87
      %p90 = scmp.ne.s32.totalorder %s75, %s89
      %p91 = scmp.eq.s32.totalorder %s23, 0
      %p92 = por %p90, %p91
      %s94 = sadd.s32 %s93, 1
      %p97 = scmp.eq.s32.totalorder %s17, 1
      %p98 = scmp.ne.s32.totalorder %s93, %s95
      %p99 = scmp.eq.s32.totalorder %s17, 0
      %p100 = por %p98, %p99
      %p101 = scmp.ne.s32.totalorder %s93, %s95
      %p102 = scmp.eq.s32.totalorder %s22, 1
      %p103 = por %p101, %p102
      %p104 = scmp.ne.s32.totalorder %s95, %s96
      %p105 = scmp.eq.s32.totalorder %s22, 0
      %p106 = por %p104, %p105
      %p107 = scmp.ne.s32.totalorder %s95, %s96
      %p108 = scmp.eq.s32.totalorder %s23, 1
      %p109 = por %p107, %p108
      %p111 = scmp.ne.s32.totalorder %s96, %s110
      %p112 = scmp.eq.s32.totalorder %s23, 0
      %p113 = por %p111, %p112
      %s115 = sadd.s32 %s114, 1
      %p118 = scmp.eq.s32.totalorder %s17, 1
      %p119 = scmp.ne.s32.totalorder %s114, %s116
      %p120 = scmp.eq.s32.totalorder %s17, 0
      %p121 = por %p119, %p120
      %p122 = scmp.ne.s32.totalorder %s114, %s116
      %p123 = scmp.eq.s32.totalorder %s22, 1
      %p124 = por %p122, %p123
      %p125 = scmp.ne.s32.totalorder %s116, %s117
      %p126 = scmp.eq.s32.totalorder %s22, 0
      %p127 = por %p125, %p126
      %p128 = scmp.ne.s32.totalorder %s116, %s117
      %p129 = scmp.eq.s32.totalorder %s23, 1
      %p130 = por %p128, %p129
      %p132 = scmp.ne.s32.totalorder %s117, %s131
      %p133 = scmp.eq.s32.totalorder %s23, 0
      %p134 = por %p132, %p133
      %s136 = sadd.s32 %s135, 1
      %p139 = scmp.eq.s32.totalorder %s17, 1
      %p140 = scmp.ne.s32.totalorder %s135, %s137
      %p141 = scmp.eq.s32.totalorder %s17, 0
      %p142 = por %p140, %p141
      %p143 = scmp.ne.s32.totalorder %s135, %s137
      %p144 = scmp.eq.s32.totalorder %s22, 1
      %p145 = por %p143, %p144
      %p146 = scmp.ne.s32.totalorder %s137, %s138
      %p147 = scmp.eq.s32.totalorder %s22, 0
      %p148 = por %p146, %p147
      %p149 = scmp.ne.s32.totalorder %s137, %s138
      %p150 = scmp.eq.s32.totalorder %s23, 1
      %p151 = por %p149, %p150
      %p153 = scmp.ne.s32.totalorder %s138, %s152
      %p154 = scmp.eq.s32.totalorder %s23, 0
      %p155 = por %p153, %p154
      %s157 = sadd.s32 %s156, 1
      %p160 = scmp.eq.s32.totalorder %s17, 1
      %p161 = scmp.ne.s32.totalorder %s156, %s158
      %p162 = scmp.eq.s32.totalorder %s17, 0
      %p163 = por %p161, %p162
      %p164 = scmp.ne.s32.totalorder %s156, %s158
      %p165 = scmp.eq.s32.totalorder %s22, 1
      %p166 = por %p164, %p165
      %p167 = scmp.ne.s32.totalorder %s158, %s159
      %p168 = scmp.eq.s32.totalorder %s22, 0
      %p169 = por %p167, %p168
      %p170 = scmp.ne.s32.totalorder %s158, %s159
      %p171 = scmp.eq.s32.totalorder %s23, 1
      %p172 = por %p170, %p171
      %p174 = scmp.ne.s32.totalorder %s159, %s173
      %p175 = scmp.eq.s32.totalorder %s23, 0
      %p176 = por %p174, %p175
      %s177 = ssub.s32 %s17, %s24
      %p178 = scmp.eq.s32.totalorder %s177, 0
      %s180 = sadd.s32 %s179, 1
      %s181 = scalar_select %p178, %s179, %s180
      %p184 = pneg %p178
      %p185 = scmp.eq.s32.totalorder %s17, 1
      %p186 = por %p184, %p185
      %p187 = scmp.ne.s32.totalorder %s179, %s182
      %p188 = scmp.eq.s32.totalorder %s17, 0
      %p189 = por %p187, %p188
      %p190 = scmp.ne.s32.totalorder %s179, %s182
      %p191 = scmp.eq.s32.totalorder %s22, 1
      %p192 = por %p190, %p191
      %p193 = scmp.ne.s32.totalorder %s182, %s183
      %p194 = scmp.eq.s32.totalorder %s22, 0
      %p195 = por %p193, %p194
      %p196 = scmp.ne.s32.totalorder %s182, %s183
      %p197 = scmp.eq.s32.totalorder %s23, 1
      %p198 = por %p196, %p197
      %p200 = scmp.ne.s32.totalorder %s183, %s199
      %p201 = scmp.eq.s32.totalorder %s23, 0
      %p202 = por %p200, %p201
      %p203 = scmp.le.s32.totalorder 1, %s17
      %p204 = scmp.lt.s32.totalorder %s17, 3
      %p205 = pnand %p203, %p204
      %p206 = pneg %p205
      // Predicated region
      $region9: #{tpu_custom_call.1} parent=5 // pred_check
        _
      $region10: #{tpu_custom_call.1} parent=5 // pred_check_branch
        %208 = sbr.rel (%p205) target = $region12
      $region11: #{tpu_custom_call.1} parent=5 // pred_region
        %s209 = ssub.s32 %s17, 1
        // Predicated region
        $region13: #{tpu_custom_call.1} parent=11 // pred_check
          %p210 = pneg %p64
        $region14: #{tpu_custom_call.1} parent=11 // pred_check_branch
          %212 = sbr.rel (%p210) target = $region16
        $region15: #{tpu_custom_call.1} parent=11 // pred_region
          _
        $region16: #{tpu_custom_call.1} parent=11 // pred_fallthru
          _
        // Predicated region
        $region17: #{tpu_custom_call.1} parent=11 // pred_check
          %p213 = pneg %p85
        $region18: #{tpu_custom_call.1} parent=11 // pred_check_branch
          %215 = sbr.rel (%p213) target = $region20
        $region19: #{tpu_custom_call.1} parent=11 // pred_region
          _
        $region20: #{tpu_custom_call.1} parent=11 // pred_fallthru
          _
        // Predicated region
        $region21: #{tpu_custom_call.1} parent=11 // pred_check
          %p216 = pneg %p106
        $region22: #{tpu_custom_call.1} parent=11 // pred_check_branch
          %218 = sbr.rel (%p216) target = $region24
        $region23: #{tpu_custom_call.1} parent=11 // pred_region
          _
        $region24: #{tpu_custom_call.1} parent=11 // pred_fallthru
          _
        // Predicated region
        $region25: #{tpu_custom_call.1} parent=11 // pred_check
          %p219 = pneg %p127
        $region26: #{tpu_custom_call.1} parent=11 // pred_check_branch
          %221 = sbr.rel (%p219) target = $region28
        $region27: #{tpu_custom_call.1} parent=11 // pred_region
          _
        $region28: #{tpu_custom_call.1} parent=11 // pred_fallthru
          _
        // Predicated region
        $region29: #{tpu_custom_call.1} parent=11 // pred_check
          %p222 = pneg %p148
        $region30: #{tpu_custom_call.1} parent=11 // pred_check_branch
          %224 = sbr.rel (%p222) target = $region32
        $region31: #{tpu_custom_call.1} parent=11 // pred_region
          _
        $region32: #{tpu_custom_call.1} parent=11 // pred_fallthru
          _
        // Predicated region
        $region33: #{tpu_custom_call.1} parent=11 // pred_check
          %p225 = pneg %p169
        $region34: #{tpu_custom_call.1} parent=11 // pred_check_branch
          %227 = sbr.rel (%p225) target = $region36
        $region35: #{tpu_custom_call.1} parent=11 // pred_region
          _
        $region36: #{tpu_custom_call.1} parent=11 // pred_fallthru
          _
      $region12: #{tpu_custom_call.1} parent=5 // pred_fallthru
        _
      %p228 = scmp.lt.s32.totalorder %s17, 2
      // Predicated region
      $region37: #{tpu_custom_call.1} parent=5 // pred_check
        %p229 = pneg %p228
      $region38: #{tpu_custom_call.1} parent=5 // pred_check_branch
        %231 = sbr.rel (%p229) target = $region40
      $region39: #{tpu_custom_call.1} parent=5 // pred_region
        // Predicated region
        $region41: #{tpu_custom_call.1} parent=39 // pred_check
          %p232 = pneg %p37
        $region42: #{tpu_custom_call.1} parent=39 // pred_check_branch
          %234 = sbr.rel (%p232) target = $region44
        $region43: #{tpu_custom_call.1} parent=39 // pred_region
          %s235 = sand.u32 %s27, 1
          %s236 = sand.u32 %s27, 1
          %s237 = smul.addr %s236, 16
          %s238 = scalar_lea.vmem [#allocation3], %s237
          %s239 = smul.addr %s17, 8
          %s240 = scalar_lea.vmem %s0, %s239
          // Predicated region
          $region45: #{tpu_custom_call.1} parent=43 // pred_check
            _
          $region46: #{tpu_custom_call.1} parent=43 // pred_check_branch
            %242 = sbr.rel (0) target = $region48
          $region47: #{tpu_custom_call.1} parent=43 // pred_region
            // Predicated region
            $region49: #{tpu_custom_call.1} parent=47 // pred_check
              _
            $region50: #{tpu_custom_call.1} parent=47 // pred_check_branch
              %244 = sbr.rel (0) target = $region52
            $region51: #{tpu_custom_call.1} parent=47 // pred_region
              // Predicated region
              $region64: #{tpu_custom_call.1} parent=51 // pred_check
                _
              $region65: #{tpu_custom_call.1} parent=51 // pred_check_branch
                %262 = sbr.rel (0) target = $region67
              $region66: #{tpu_custom_call.1} parent=51 // pred_region
                loop: start=0, step=1, limit=1
                $region68: #{tpu_custom_call.1} parent=66 // loop_pre_header
                  _
                $region69: #{tpu_custom_call.1} parent=66 // loop_header
                  %s264 = sphi 0, %s268
                  %p265 = scmp.ge.s32.totalorder %s264, 1
                  %s269 = sphi %s240, %s240
                  %s270 = sphi %s238, %s238
                $region70: #{tpu_custom_call.1} parent=66 // loop_header_branch
                  %267 = sbr.rel (%p265) target = $region74
                $region71: #{tpu_custom_call.1} parent=66 // loop_body
                  %v271 = vld [vmem:[%s269] sm:$0xff]
                  %272 = vst [vmem:[%s270] sm:$0xff] %v271
                  %v273 = vld [vmem:[%s269 + $0x10] sm:$0xff]
                  %274 = vst [vmem:[%s270 + $0x8] sm:$0xff] %v273
                $region72: #{tpu_custom_call.1} parent=66 // loop_footer
                  %s268 = sadd.s32 1, %s264
                $region73: #{tpu_custom_call.1} parent=66 // loop_footer_branch
                  %263 = sbr.rel target = $region69
                $region74: #{tpu_custom_call.1} parent=66 // loop_exit
                  _
              $region67: #{tpu_custom_call.1} parent=51 // pred_fallthru
                _
              // Predicated region
              $region75: #{tpu_custom_call.1} parent=51 // pred_check
                _
              $region76: #{tpu_custom_call.1} parent=51 // pred_check_branch
                %276 = sbr.rel target = $region78
              $region77: #{tpu_custom_call.1} parent=51 // pred_region
                _
              $region78: #{tpu_custom_call.1} parent=51 // pred_fallthru
                _
            $region52: #{tpu_custom_call.1} parent=47 // pred_fallthru
              _
            // Predicated region
            $region53: #{tpu_custom_call.1} parent=47 // pred_check
              _
            $region54: #{tpu_custom_call.1} parent=47 // pred_check_branch
              %246 = sbr.rel target = $region56
            $region55: #{tpu_custom_call.1} parent=47 // pred_region
              %s248 = ssub.s32 256, 1
              loop: start=0, step=1, limit=1
              $region57: #{tpu_custom_call.1} parent=55 // loop_pre_header
                _
              $region58: #{tpu_custom_call.1} parent=55 // loop_header
                %s250 = sphi 0, %s254
                %p251 = scmp.ge.s32.totalorder %s250, 1
                %s255 = sphi %s240, %s240
                %s256 = sphi %s238, %s238
              $region59: #{tpu_custom_call.1} parent=55 // loop_header_branch
                %253 = sbr.rel (%p251) target = $region63
              $region60: #{tpu_custom_call.1} parent=55 // loop_body
                %v257 = vld [vmem:[%s255] sm:%s248]
                %258 = vst [vmem:[%s256] sm:%s248] %v257
                %v259 = vld [vmem:[%s255 + $0x10] sm:%s248]
                %260 = vst [vmem:[%s256 + $0x8] sm:%s248] %v259
              $region61: #{tpu_custom_call.1} parent=55 // loop_footer
                %s254 = sadd.s32 1, %s250
              $region62: #{tpu_custom_call.1} parent=55 // loop_footer_branch
                %249 = sbr.rel target = $region58
              $region63: #{tpu_custom_call.1} parent=55 // loop_exit
                _
            $region56: #{tpu_custom_call.1} parent=47 // pred_fallthru
              _
          $region48: #{tpu_custom_call.1} parent=43 // pred_fallthru
            _
          %277 = vnop
        $region44: #{tpu_custom_call.1} parent=39 // pred_fallthru
          _
      $region40: #{tpu_custom_call.1} parent=5 // pred_fallthru
        _
      %p278 = scmp.le.s32.totalorder 1, %s17
      %p279 = scmp.lt.s32.totalorder %s17, 3
      %p280 = pnand %p278, %p279
      %p281 = pneg %p280
      // Predicated region
      $region79: #{tpu_custom_call.1} parent=5 // pred_check
        _
      $region80: #{tpu_custom_call.1} parent=5 // pred_check_branch
        %283 = sbr.rel (%p280) target = $region82
      $region81: #{tpu_custom_call.1} parent=5 // pred_region
        %s284 = ssub.s32 %s17, 1
        %s285 = sand.u32 %s30, 1
        %s286 = sand.u32 %s30, 1
        %s287 = smul.addr %s286, 16
        %s288 = scalar_lea.vmem [#allocation3], %s287
        // Predicated region
        $region83: #{tpu_custom_call.1} parent=81 // pred_check
          %p289 = pneg %p43
        $region84: #{tpu_custom_call.1} parent=81 // pred_check_branch
          %291 = sbr.rel (%p289) target = $region86
        $region85: #{tpu_custom_call.1} parent=81 // pred_region
          _
        $region86: #{tpu_custom_call.1} parent=81 // pred_fallthru
          _
        %s292 = sand.u32 %s30, 1
        %s293 = sand.u32 %s30, 1
        %s294 = smul.addr %s293, 16
        %s295 = scalar_lea.vmem [#allocation3], %s294
        %p296 = pneg %p43
        %p297 = pneg %p40
        %p298 = pneg %p64
        %p299 = pneg %p61
        %p300 = pneg %p85
        %p301 = pneg %p82
        %p302 = pneg %p106
        %p303 = pneg %p103
        %p304 = pneg %p127
        %p305 = pneg %p124
        %p306 = pneg %p148
        %p307 = pneg %p145
        %p308 = pneg %p169
        %p309 = pneg %p166
        %p310 = pneg %p195
        %p311 = pneg %p192
        %s312 = sand.u32 %s182, 1
        %s313 = scalar_lea.sflag [#allocation5], %s312
        %s314 = sand.u32 %s182, 1
        %s315 = scalar_lea.vmem [#allocation4], %s314
        %v317 = vld [vmem:[%s288] sm:$0xff]
        %v318 = vld [vmem:[%s288 + $0x8] sm:$0xff]
        %v319 = vpack.c.bf16 %v318, %v317
        %v320 = vld [vmem:[%s1] sm:$0xff]
        %v321 = vld [vmem:[%s1 + $0x8] sm:$0xff]
        %v322 = vld [vmem:[%s1 + $0x10] sm:$0xff]
        %v323 = vld [vmem:[%s1 + $0x18] sm:$0xff]
        %v324 = vpack.c.bf16 %v321, %v320
        %v325 = vpack.c.bf16 %v323, %v322
        %v326 = vld [vmem:[%s2] sm:$0xff]
        %v327 = vld [vmem:[%s2 + $0x8] sm:$0xff]
        %v328 = vld [vmem:[%s2 + $0x10] sm:$0xff]
        %v329 = vld [vmem:[%s2 + $0x18] sm:$0xff]
        %331 = vset.pattern.permute.xlu0 0
        %332 = vperm.xlu0 %331, %v326
        %v333 = vpop.permute.xlu0 %332
        %336 = vset.pattern.permute.xlu0 0
        %337 = vperm.xlu0 %336, %v327
        %v338 = vpop.permute.xlu0 %337
        %341 = vset.pattern.permute.xlu0 0
        %342 = vperm.xlu0 %341, %v328
        %v343 = vpop.permute.xlu0 %342
        %346 = vset.pattern.permute.xlu0 0
        %347 = vperm.xlu0 %346, %v329
        %v348 = vpop.permute.xlu0 %347
        %vm350 = vcmask 130048
        %v352 = vsel %vm350, %v324, 0
        %v355 = vsel %vm350, %v325, 0
        %357 = vmatprep.subr.bf16.mxu0 0
        %358 = vmatpush1.bf16.msra.mxu0 0
        %359 = vmatprep.subr.bf16.mxu0 0
        %360 = vmatpush1.bf16.msra.mxu0 0
        %361 = vmatprep.subr.bf16.mxu0 0
        %362 = vmatpush1.bf16.msra.mxu0 0
        %363 = vmatprep.subr.bf16.mxu0 0
        %364 = vmatpush1.bf16.msra.mxu0 0
        %365 = vmatprep.subr.bf16.mxu0 0
        %366 = vmatpush1.bf16.msra.mxu0 0
        %367 = vmatprep.subr.bf16.mxu0 0
        %368 = vmatpush1.bf16.msra.mxu0 0
        %369 = vmatprep.subr.bf16.mxu0 0
        %370 = vmatpush1.bf16.msra.mxu0 0
        %371 = vmatprep.subr.bf16.mxu0 0
        %372 = vmatpush1.bf16.msra.mxu0 %v319
        %373 = vmatprep.subr.bf16.mxu0 0
        %374 = vmatpush2.bf16.msra.mxu0 0
        %375 = vmatprep.subr.bf16.mxu0 0
        %376 = vmatpush2.bf16.msra.mxu0 0
        %377 = vmatprep.subr.bf16.mxu0 0
        %378 = vmatpush2.bf16.msra.mxu0 0
        %379 = vmatprep.subr.bf16.mxu0 0
        %380 = vmatpush2.bf16.msra.mxu0 0
        %381 = vmatprep.subr.bf16.mxu0 0
        %382 = vmatpush2.bf16.msra.mxu0 0
        %383 = vmatprep.subr.bf16.mxu0 0
        %384 = vmatpush2.bf16.msra.mxu0 0
        %385 = vmatprep.subr.bf16.mxu0 0
        %386 = vmatpush2.bf16.msra.mxu0 0
        %387 = vmatprep.subr.bf16.mxu0 0
        %388 = vmatpush2.bf16.msra.mxu0 0
        %389 = vmatprep.mubr.bf16.mxu0 0
        %390 = vmatmul.mubr.bf16.gmra.mxu0 %v352
        %v391 = vpop.f32.mrf.mxu0
        %v392 = vadd.f32 %v333, %v391
        %v393 = vpop.f32.mrf.mxu0
        %v394 = vpop.f32.mrf.mxu0
        %v395 = vadd.f32 %v338, %v394
        %v396 = vpop.f32.mrf.mxu0
        %397 = vmatprep.mubr.bf16.mxu0 0
        %398 = vmatmul.mubr.bf16.gmra.mxu0 %v355
        %v399 = vpop.f32.mrf.mxu0
        %v400 = vadd.f32 %v343, %v399
        %v401 = vpop.f32.mrf.mxu0
        %v402 = vpop.f32.mrf.mxu0
        %v403 = vadd.f32 %v348, %v402
        %v404 = vpop.f32.mrf.mxu0
        %405 = vdwg.mxu0
        %v406 = vtanh.pop %v392
        %v407 = vtanh.pop %v395
        %v408 = vtanh.pop %v400
        %v409 = vtanh.pop %v403
        %v410 = vld [vmem:[%s3] sm:$0xff]
        %v411 = vld [vmem:[%s3 + $0x8] sm:$0xff]
        %v412 = vld [vmem:[%s3 + $0x10] sm:$0xff]
        %v413 = vld [vmem:[%s3 + $0x18] sm:$0xff]
        %v414 = vpack.c.bf16 %v411, %v410
        %v415 = vpack.c.bf16 %v413, %v412
        %v416 = vpack.c.bf16 %v407, %v406
        %v417 = vpack.c.bf16 %v409, %v408
        %v418 = vld [vmem:[%s4] sm:$0xff]
        %v419 = vld [vmem:[%s4 + $0x8] sm:$0xff]
        %v420 = vld [vmem:[%s4 + $0x10] sm:$0xff]
        %v421 = vld [vmem:[%s4 + $0x18] sm:$0xff]
        %423 = vset.pattern.permute.xlu0 0
        %424 = vperm.xlu0 %423, %v418
        %v425 = vpop.permute.xlu0 %424
        %428 = vset.pattern.permute.xlu0 0
        %429 = vperm.xlu0 %428, %v419
        %v430 = vpop.permute.xlu0 %429
        %433 = vset.pattern.permute.xlu0 0
        %434 = vperm.xlu0 %433, %v420
        %v435 = vpop.permute.xlu0 %434
        %438 = vset.pattern.permute.xlu0 0
        %439 = vperm.xlu0 %438, %v421
        %v440 = vpop.permute.xlu0 %439
        %vm442 = vcmask 261120
        %v444 = vsel %vm442, %v414, 0
        %v447 = vsel %vm442, %v415, 0
        %449 = vmatprep.subr.bf16.mxu0 0
        %450 = vmatpush1.bf16.msra.mxu0 0
        %451 = vmatprep.subr.bf16.mxu0 0
        %452 = vmatpush1.bf16.msra.mxu0 0
        %453 = vmatprep.subr.bf16.mxu0 0
        %454 = vmatpush1.bf16.msra.mxu0 0
        %455 = vmatprep.subr.bf16.mxu0 0
        %456 = vmatpush1.bf16.msra.mxu0 0
        %457 = vmatprep.subr.bf16.mxu0 0
        %458 = vmatpush1.bf16.msra.mxu0 0
        %459 = vmatprep.subr.bf16.mxu0 0
        %460 = vmatpush1.bf16.msra.mxu0 0
        %461 = vmatprep.subr.bf16.mxu0 0
        %462 = vmatpush1.bf16.msra.mxu0 %v417
        %463 = vmatprep.subr.bf16.mxu0 0
        %464 = vmatpush1.bf16.msra.mxu0 %v416
        %465 = vmatprep.subr.bf16.mxu0 0
        %466 = vmatpush2.bf16.msra.mxu0 0
        %467 = vmatprep.subr.bf16.mxu0 0
        %468 = vmatpush2.bf16.msra.mxu0 0
        %469 = vmatprep.subr.bf16.mxu0 0
        %470 = vmatpush2.bf16.msra.mxu0 0
        %471 = vmatprep.subr.bf16.mxu0 0
        %472 = vmatpush2.bf16.msra.mxu0 0
        %473 = vmatprep.subr.bf16.mxu0 0
        %474 = vmatpush2.bf16.msra.mxu0 0
        %475 = vmatprep.subr.bf16.mxu0 0
        %476 = vmatpush2.bf16.msra.mxu0 0
        %477 = vmatprep.subr.bf16.mxu0 0
        %478 = vmatpush2.bf16.msra.mxu0 0
        %479 = vmatprep.subr.bf16.mxu0 0
        %480 = vmatpush2.bf16.msra.mxu0 0
        %481 = vmatprep.mubr.bf16.mxu0 0
        %482 = vmatmul.mubr.bf16.gmra.mxu0 %v444
        %v483 = vpop.f32.mrf.mxu0
        %v484 = vadd.f32 %v425, %v483
        %v485 = vpop.f32.mrf.mxu0
        %v486 = vpop.f32.mrf.mxu0
        %v487 = vadd.f32 %v430, %v486
        %v488 = vpop.f32.mrf.mxu0
        %489 = vmatprep.mubr.bf16.mxu0 0
        %490 = vmatmul.mubr.bf16.gmra.mxu0 %v447
        %v491 = vpop.f32.mrf.mxu0
        %v492 = vadd.f32 %v435, %v491
        %v493 = vpop.f32.mrf.mxu0
        %v494 = vpop.f32.mrf.mxu0
        %v495 = vadd.f32 %v440, %v494
        %v496 = vpop.f32.mrf.mxu0
        %497 = vdwg.mxu0
        %v498 = vtanh.pop %v484
        %v499 = vtanh.pop %v487
        %v500 = vtanh.pop %v492
        %v501 = vtanh.pop %v495
        %v502 = vld [vmem:[%s5] sm:$0x1]
        %v503 = vpack.c.bf16 %v502, %v502
        %v504 = vpack.c.bf16 %v499, %v498
        %v505 = vpack.c.bf16 %v501, %v500
        %s506 = sld [smem:[#allocation2]]
        %v507 = vstv %s506
        %v509 = vsel %vm442, %v503, 0
        %511 = vmatprep.subr.bf16.mxu0 0
        %512 = vmatpush1.bf16.msra.mxu0 0
        %513 = vmatprep.subr.bf16.mxu0 0
        %514 = vmatpush1.bf16.msra.mxu0 0
        %515 = vmatprep.subr.bf16.mxu0 0
        %516 = vmatpush1.bf16.msra.mxu0 0
        %517 = vmatprep.subr.bf16.mxu0 0
        %518 = vmatpush1.bf16.msra.mxu0 0
        %519 = vmatprep.subr.bf16.mxu0 0
        %520 = vmatpush1.bf16.msra.mxu0 0
        %521 = vmatprep.subr.bf16.mxu0 0
        %522 = vmatpush1.bf16.msra.mxu0 0
        %523 = vmatprep.subr.bf16.mxu0 0
        %524 = vmatpush1.bf16.msra.mxu0 %v505
        %525 = vmatprep.subr.bf16.mxu0 0
        %526 = vmatpush1.bf16.msra.mxu0 %v504
        %527 = vmatprep.subr.bf16.mxu0 0
        %528 = vmatpush2.bf16.msra.mxu0 0
        %529 = vmatprep.subr.bf16.mxu0 0
        %530 = vmatpush2.bf16.msra.mxu0 0
        %531 = vmatprep.subr.bf16.mxu0 0
        %532 = vmatpush2.bf16.msra.mxu0 0
        %533 = vmatprep.subr.bf16.mxu0 0
        %534 = vmatpush2.bf16.msra.mxu0 0
        %535 = vmatprep.subr.bf16.mxu0 0
        %536 = vmatpush2.bf16.msra.mxu0 0
        %537 = vmatprep.subr.bf16.mxu0 0
        %538 = vmatpush2.bf16.msra.mxu0 0
        %539 = vmatprep.subr.bf16.mxu0 0
        %540 = vmatpush2.bf16.msra.mxu0 0
        %541 = vmatprep.subr.bf16.mxu0 0
        %542 = vmatpush2.bf16.msra.mxu0 0
        %543 = vmatprep.mubr.bf16.mxu0 0
        %544 = vmatmul.mubr.bf16.gmra.mxu0 %v509
        %v545 = vpop.f32.mrf.mxu0
        %v546 = vadd.f32 %v507, %v545
        %v547 = vpop.f32.mrf.mxu0
        %v548 = vpop.f32.mrf.mxu0
        %v549 = vpop.f32.mrf.mxu0
        %550 = vdwg.mxu0
        %551 = vst [vmem:[%s315] sm:$0x1] %v546
        %s552 = sand.u32 %s182, 1
        %s553 = scalar_lea.sflag [#allocation5], %s552
        %s554 = sand.u32 %s182, 1
        %s555 = scalar_lea.vmem [#allocation4], %s554
        // Predicated region
        $region87: #{tpu_custom_call.1} parent=81 // pred_check
          %p556 = pneg %p192
        $region88: #{tpu_custom_call.1} parent=81 // pred_check_branch
          %558 = sbr.rel (%p556) target = $region90
        $region89: #{tpu_custom_call.1} parent=81 // pred_region
          %s560 = ssub.s32 16, 16
          %561 = vsyncadd %s553, %s560
          %s562 = smul.addr %s22, 16
          %s563 = scalar_lea.hbm %s7, %s562
          %s565 = sshll.u32 %s555, 4
          %s566 = int_to_ptr.vmem [resolvable:$true] %s565
          %568 = dma.vmem_to_hbm [thread:$0]  %s566, 16, %s563, %s553
        $region90: #{tpu_custom_call.1} parent=81 // pred_fallthru
          _
      $region82: #{tpu_custom_call.1} parent=5 // pred_fallthru
        _
      %p569 = scmp.le.s32.totalorder 2, %s17
      // Predicated region
      $region91: #{tpu_custom_call.1} parent=5 // pred_check
        %p570 = pneg %p569
      $region92: #{tpu_custom_call.1} parent=5 // pred_check_branch
        %572 = sbr.rel (%p570) target = $region94
      $region93: #{tpu_custom_call.1} parent=5 // pred_region
        %s573 = ssub.s32 %s17, 2
        // Predicated region
        $region95: #{tpu_custom_call.1} parent=93 // pred_check
          %p574 = pneg %p198
        $region96: #{tpu_custom_call.1} parent=93 // pred_check_branch
          %576 = sbr.rel (%p574) target = $region98
        $region97: #{tpu_custom_call.1} parent=93 // pred_region
          %s577 = sand.u32 %s183, 1
          %s578 = scalar_lea.sflag [#allocation5], %s577
          %s579 = sand.u32 %s183, 1
          %s580 = scalar_lea.vmem [#allocation4], %s579
          %581 = dma.done %s578, 16
        $region98: #{tpu_custom_call.1} parent=93 // pred_fallthru
          _
      $region94: #{tpu_custom_call.1} parent=5 // pred_fallthru
        _
    $region6: #{tpu_custom_call.1} parent=1 // loop_footer
      %s21 = sadd.s32 1, %s17
    $region7: #{tpu_custom_call.1} parent=1 // loop_footer_branch
      %16 = sbr.rel target = $region3
    $region8: #{tpu_custom_call.1} parent=1 // loop_exit
      _
    %582 = vsyncpa [#allocation5], 1
    %s583 = scalar_lea.sflag [#allocation5], 1
    %584 = vsyncpa %s583, 1

</llo_original>
